<compile_context>
chip_gen: v7x
topology: tpu7x:2x2x1
jax: 0.10.0
libtpu: 0.0.40
codegen_flags: <defaults>
</compile_context>

<pallas_src>
import functools

import jax
import jax.numpy as jnp
from jax.experimental import pallas as pl
from jax.experimental.pallas import tpu as pltpu

_LANE_CANDIDATES = (512, 256, 128)     # lane-dense last dims (multiples of 128)
_TILE_BYTES = 4 * 1024 * 1024          # ~4 MiB tiles; x2 arrays x2 buffers ~= 16 MiB
_VMEM_LIMIT_BYTES = 32 * 1024 * 1024   # explicit: > v5e's 16 MiB default, <= v7x physical


def _scale_kernel(w_ref, x_ref, o_ref):
    # w_ref: (1, 1) scalar in SMEM; x_ref / o_ref: (tile_rows, lanes) in VMEM.
    o_ref[...] = x_ref[...] * w_ref[0, 0]


def _scale_2d(x2d, w2d):
    """Pallas elementwise scale over a lane-dense (rows, lanes) slab."""
    rows, lanes = x2d.shape
    itemsize = jnp.dtype(x2d.dtype).itemsize

    # Largest sublane-aligned tile that stays under _TILE_BYTES.
    max_tile_rows = max(8, (_TILE_BYTES // (lanes * itemsize)) // 8 * 8)
    if rows <= max_tile_rows:
        tile_rows = rows          # block == full array dim: always a legal block
    else:
        tile_rows = max_tile_rows  # multiple of 8; ragged last block is masked by Pallas

    grid = (pl.cdiv(rows, tile_rows),)

    return pl.pallas_call(
        _scale_kernel,
        out_shape=jax.ShapeDtypeStruct((rows, lanes), x2d.dtype),
        grid=grid,
        in_specs=[
            # Scalar weight: whole (1, 1) array in SMEM every grid step.
            pl.BlockSpec(memory_space=pltpu.MemorySpace.SMEM),
            # Lane-dense row tiles, auto double-buffered by the pipeline.
            pl.BlockSpec((tile_rows, lanes), lambda i: (i, 0)),
        ],
        out_specs=pl.BlockSpec((tile_rows, lanes), lambda i: (i, 0)),
        # Output reuses the input HBM buffer (pure elementwise map; each block
        # is read before it is written back and blocks are disjoint).
        input_output_aliases={1: 0},
        compiler_params=pltpu.CompilerParams(
            dimension_semantics=("parallel",),
            vmem_limit_bytes=_VMEM_LIMIT_BYTES,
        ),
    )(w2d, x2d)


@functools.partial(jax.jit, donate_argnums=(0,))
def conv2d_1x1(x, weight):
    """Equivalent of F.conv2d(x, weight) for weight of shape (1, 1, 1, 1).

    x: (N, 1, H, W), NCHW layout. Donated: the output may reuse its buffer.
    weight: (1, 1, 1, 1), same dtype.
    returns: (N, 1, H, W).
    """
    N, C, H, W = x.shape
    assert C == 1 and weight.shape == (1, 1, 1, 1)

    total = N * C * H * W
    w2d = weight.reshape(1, 1).astype(x.dtype)

    # Pick the widest lane-dense layout that divides the element count so we
    # need no pad and no trailing slice (each would be an extra full HBM pass).
    lanes = next((l for l in _LANE_CANDIDATES if total % l == 0), None)

    if lanes is not None:
        x2d = x.reshape(total // lanes, lanes)
        out2d = _scale_2d(x2d, w2d)
        return out2d.reshape(N, C, H, W)

    # Ragged fallback: pad to a multiple of 128 lanes, scale, slice the pad off.
    lanes = 128
    rows = pl.cdiv(total, lanes)
    x_flat = jnp.pad(x.reshape(-1), (0, rows * lanes - total))
    out2d = _scale_2d(x_flat.reshape(rows, lanes), w2d)
    return out2d.reshape(-1)[:total].reshape(N, C, H, W)


if __name__ == "__main__":
    key = jax.random.PRNGKey(0)
    # Conv weight has in_channels == 1, so the input must have C == 1.
    x = jax.random.normal(key, (2, 1, 16, 16), dtype=jnp.float32)
    # Matches torch.nn.Parameter(torch.ones([1, 1, 1, 1])).
    weight = jnp.ones((1, 1, 1, 1), dtype=jnp.float32)

    # Reference: 1x1 single-channel conv is an elementwise scale.  Compute it
    # BEFORE the kernel call because x is donated to conv2d_1x1.
    ref = x * weight[0, 0, 0, 0]

    out = conv2d_1x1(x, weight)
    out = jax.block_until_ready(out)

    assert out.shape == ref.shape
    assert jnp.allclose(out, ref, atol=1e-6), "mismatch vs reference"

    print("KERNEL_OK")
</pallas_src>

<mosaic_0001>
module attributes {stable_mosaic.version = 11 : i64} {
  func.func @_scale_kernel(%arg0: i32, %arg1: memref<1x1xf32, #tpu.memory_space<smem>>, %arg2: memref<1x512xf32, #tpu.memory_space<vmem>>, %arg3: memref<1x512xf32, #tpu.memory_space<vmem>>) attributes {dimension_semantics = [#tpu.dimension_semantics<parallel>], iteration_bounds = array<i64: 1>, scalar_prefetch = 0 : i64, scratch_operands = 0 : i64, tpu.core_type = #tpu.core_type<tc>, window_params = [{transform_indices = @transform_0, window_bounds = array<i64: 1, 1>}, {transform_indices = @transform_1, window_bounds = array<i64: 1, 512>}, {transform_indices = @transform_2, window_bounds = array<i64: 1, 512>}]} {
    %c0 = arith.constant 0 : index
    %c0_0 = arith.constant 0 : index
    %0 = vector.load %arg2[%c0, %c0_0] : memref<1x512xf32, #tpu.memory_space<vmem>>, vector<1x512xf32>
    %c0_1 = arith.constant 0 : index
    %c0_2 = arith.constant 0 : index
    %1 = memref.load %arg1[%c0_1, %c0_2] : memref<1x1xf32, #tpu.memory_space<smem>>
    %2 = vector.broadcast %1 : f32 to vector<1x512xf32>
    %3 = arith.mulf %0, %2 : vector<1x512xf32>
    %c0_3 = arith.constant 0 : index
    %c0_4 = arith.constant 0 : index
    %4 = vector.load %arg3[%c0_3, %c0_4] : memref<1x512xf32, #tpu.memory_space<vmem>>, vector<1x512xf32>
    tpu.vector_store %arg3[%c0_3, %c0_4], %3 {strides = array<i32>} : memref<1x512xf32, #tpu.memory_space<vmem>>, vector<1x512xf32>,
    return
  }
  func.func @transform_0(%arg0: i32) -> (i32, i32) {
    %c0_i32 = arith.constant 0 : i32
    %c0_i32_0 = arith.constant 0 : i32
    %c0_i32_1 = arith.constant 0 : i32
    return %c0_i32, %c0_i32_0 : i32, i32
  }
  func.func @transform_1(%arg0: i32) -> (i32, i32) {
    %c0_i32 = arith.constant 0 : i32
    %c0_i32_0 = arith.constant 0 : i32
    return %arg0, %c0_i32 : i32, i32
  }
  func.func @transform_2(%arg0: i32) -> (i32, i32) {
    %c0_i32 = arith.constant 0 : i32
    %c0_i32_0 = arith.constant 0 : i32
    return %arg0, %c0_i32 : i32, i32
  }
}

</mosaic_0001>

<llo_original>
// kernel: conv2d_1x1.1
$region0: #{conv2d_1x1.1}
  #allocation0 [shape = 'u32[]', space=smem, size = 0x4, offset = 0x4, fixed_abs, tag = 'smem constant byte address 0x4 - core index']
  #allocation1 [shape = 'u32[144,128]{1,0:T(1,128)}', space=vmem, size = 0x12000, scoped, tag = 'internal scratch']
  #allocation2 [shape = 'f32[1,1]{1,0:T(1,128)S(6)}', space=smem, size = 0x200, scoped, tag = 'scoped memory for conv2d_1x1.1']
  %s0 = inlined_call_operand.<no memory space> [shape: f32[1,1], index: 0, kind: input, shape index: {}]
  %s1 = inlined_call_operand.vmem [shape: f32[1,512], index: 1, kind: input, shape index: {}, may-alias: {1,2}]
  %s2 = inlined_call_operand.vmem [shape: f32[1,512], index: 2, kind: output, shape index: {}, may-alias: {1,2}]
  %s3 = sld [smem:[#allocation0]]
  $region18: #{conv2d_1x1.1} parent=0
    _
  %s5 = ssub.s32 1, %s3
  %s6 = scalar_select 0, %s5, %s3
  %7 = sst [smem:[#allocation2]] %s0
  // Predicated region
  $region2: #{conv2d_1x1.1} parent=0 // pred_check
    _
  $region3: #{conv2d_1x1.1} parent=0 // pred_check_branch
    %9 = sbr.rel (0) target = $region5
  $region4: #{conv2d_1x1.1} parent=0 // pred_region
    _
  $region5: #{conv2d_1x1.1} parent=0 // pred_fallthru
    _
  // Predicated region
  $region6: #{conv2d_1x1.1} parent=0 // pred_check
    _
  $region7: #{conv2d_1x1.1} parent=0 // pred_check_branch
    %11 = sbr.rel (0) target = $region9
  $region8: #{conv2d_1x1.1} parent=0 // pred_region
    _
  $region9: #{conv2d_1x1.1} parent=0 // pred_fallthru
    _
  %v12 = vld [vmem:[%s1] sm:$0xf]
  %s13 = sld [smem:[#allocation2]]
  %v14 = vstv %s13
  %v15 = vmul.f32 %v12, %v14
  %v16 = vlaneseq
  %vm17 = vcmp.ge.s32.totalorder %v16, 0
  %vm18 = vcmp.lt.s32.totalorder %v16, 512
  %vm19 = vmand %vm17, %vm18
  %20 = vst.msk [vmem:[%s2] sm:$0xf] %vm19, %v15
  // Predicated region
  $region10: #{conv2d_1x1.1} parent=0 // pred_check
    _
  $region11: #{conv2d_1x1.1} parent=0 // pred_check_branch
    %22 = sbr.rel (0) target = $region13
  $region12: #{conv2d_1x1.1} parent=0 // pred_region
    _
  $region13: #{conv2d_1x1.1} parent=0 // pred_fallthru
    _
  // Predicated region
  $region14: #{conv2d_1x1.1} parent=0 // pred_check
    _
  $region15: #{conv2d_1x1.1} parent=0 // pred_check_branch
    %24 = sbr.rel (0) target = $region17
  $region16: #{conv2d_1x1.1} parent=0 // pred_region
    _
  $region17: #{conv2d_1x1.1} parent=0 // pred_fallthru
    _

</llo_original>
